<compile_context>
chip_gen: v7x
topology: tpu7x:2x2x1
jax: 0.10.0
libtpu: 0.0.40
codegen_flags: <defaults>
</compile_context>

<pallas_src>
import functools

import jax
import jax.numpy as jnp
from jax import lax
from jax.experimental import pallas as pl
from jax.experimental.pallas import tpu as pltpu

LANES = 128
CHUNK = 8  # sublane chunk (rows) for the inner compute loop


def _round_up(x, m):
    return ((x + m - 1) // m) * m


def _custom_loss_kernel(logit_ref, tgt_ref, o1_ref, o2_ref, pw_ref,
                        res_ref, acc_ref, *, total_b, inv_b, tr, steps):
    """Refs:
      logit_ref : (3, tr, 128) f32  -- outputs.T, channel-major
      tgt/o1/o2/pw_ref : (tr, 128) f32
      res_ref   : (1, 8, 128) f32   -- per-core lane-dense partial
      acc_ref   : (8, 128) f32 VMEM accumulator
    """
    i = pl.program_id(1)  # reduction axis

    @pl.when(i == 0)
    def _():
        acc_ref[...] = jnp.zeros_like(acc_ref)

    # Global element offset of this block (batch is row-major folded into (rows,128)).
    block_idx = pl.program_id(0) * steps + i
    base = block_idx * (tr * LANES)

    # Flat index within an (8, 128) chunk; hoisted out of the chunk loop.
    row_ids = lax.broadcasted_iota(jnp.int32, (CHUNK, LANES), 0)
    lane_ids = lax.broadcasted_iota(jnp.int32, (CHUNK, LANES), 1)
    flat = row_ids * LANES + lane_ids

    n_chunks = tr // CHUNK

    def chunk_body(c, carry):
        r0 = pl.multiple_of(c * CHUNK, CHUNK)

        # softmax(outputs / 0.5) == softmax(2 * outputs)
        l0 = logit_ref[0, pl.ds(r0, CHUNK), :] * 2.0
        l1 = logit_ref[1, pl.ds(r0, CHUNK), :] * 2.0
        l2 = logit_ref[2, pl.ds(r0, CHUNK), :] * 2.0
        tgt = tgt_ref[pl.ds(r0, CHUNK), :]
        o1 = o1_ref[pl.ds(r0, CHUNK), :]
        o2 = o2_ref[pl.ds(r0, CHUNK), :]
        pw = pw_ref[pl.ds(r0, CHUNK), :]

        # 3-way softmax with elementwise max/add (pure VPU + EUP, no XLU).
        m = jnp.maximum(jnp.maximum(l0, l1), l2)
        e0 = jnp.exp(l0 - m)
        e1 = jnp.exp(l1 - m)
        e2 = jnp.exp(l2 - m)
        inv_denom = 1.0 / (e0 + e1 + e2)  # exact divide (rtol=1e-5 check)
        p0 = e0 * inv_denom
        p1 = e1 * inv_denom
        p2 = e2 * inv_denom

        t1 = (tgt == 1.0).astype(jnp.float32)
        t0 = (tgt == 0.0).astype(jnp.float32)

        # expected_gain + expected_loss fused:  p*t*(odds-1) + p*t*(-1) = p*t*(odds-2)
        ep = p0 * t1 * (o1 - 2.0) + p1 * t0 * (o2 - 2.0)
        tpp = t1 * (o1 - 1.0) + t0 * (o2 - 1.0)
        diff = ep - tpp

        zeros = jnp.zeros_like(p2)
        owp1 = jnp.where(o1 > 4.0, (1.0 - p1) * o1, zeros)
        owp2 = jnp.where(o2 > 4.0, (1.0 - p0) * o2, zeros)
        ncw = jnp.where((pw < 0.6) & (pw > 0.4),
                        (1.0 - p2) * (1.0 + 2.0 / (o1 + o2)),
                        zeros)

        # Validity mask computed in-kernel (no mask channel shipped from HBM).
        rem = total_b - (base + c * (CHUNK * LANES))
        mask = (flat < rem).astype(jnp.float32)

        per = mask * ((diff * diff - ep) * inv_b + owp1 + owp2 + 5.0 * ncw)
        acc_ref[...] += per
        return carry

    lax.fori_loop(0, n_chunks, chunk_body, 0,
                  unroll=True if n_chunks <= 8 else 4)

    @pl.when(i == pl.num_programs(1) - 1)
    def _():
        res_ref[0] = acc_ref[...]


def custom_loss(outputs, targets, odds_p1, odds_p2, prob_p1_win, *, block_rows=1024):
    """outputs: (B, 3); targets/odds_p1/odds_p2/prob_p1_win: (B,). Returns f32 scalar.

    Equivalent to the PyTorch CustomLoss.forward.
    """
    B = outputs.shape[0]
    f32 = jnp.float32

    rows = pl.cdiv(B, LANES)                     # lane-folded batch rows
    rows8 = _round_up(max(rows, 1), CHUNK)       # sublane alignment
    tr = min(_round_up(block_rows, CHUNK), rows8)  # rows per DMA block
    r_pad = _round_up(rows8, tr)
    b_pad = r_pad * LANES

    n_blocks = r_pad // tr
    # Optional 2-way split across TensorCores (effective on v7x; harmless elsewhere).
    n_par = 2 if (n_blocks >= 2 and n_blocks % 2 == 0) else 1
    steps = n_blocks // n_par

    def to_tiles(x):  # (B,) -> (r_pad, 128), zero-padded tail
        x = x.astype(f32)
        x = jnp.pad(x, (0, b_pad - B))
        return x.reshape(r_pad, LANES)

    logits = outputs.astype(f32).T                               # (3, B)
    logits = jnp.pad(logits, ((0, 0), (0, b_pad - B)))
    logits = logits.reshape(3, r_pad, LANES)
    tgt = to_tiles(targets)
    o1 = to_tiles(odds_p1)
    o2 = to_tiles(odds_p2)
    pw = to_tiles(prob_p1_win)

    kernel = functools.partial(_custom_loss_kernel,
                               total_b=B, inv_b=1.0 / B, tr=tr, steps=steps)

    blk_map = lambda p, i: (p * steps + i, 0)
    partial = pl.pallas_call(
        kernel,
        out_shape=jax.ShapeDtypeStruct((n_par, CHUNK, LANES), f32),
        grid_spec=pltpu.PrefetchScalarGridSpec(
            num_scalar_prefetch=0,
            grid=(n_par, steps),
            in_specs=[
                pl.BlockSpec((3, tr, LANES), lambda p, i: (0, p * steps + i, 0)),
                pl.BlockSpec((tr, LANES), blk_map),
                pl.BlockSpec((tr, LANES), blk_map),
                pl.BlockSpec((tr, LANES), blk_map),
                pl.BlockSpec((tr, LANES), blk_map),
            ],
            out_specs=pl.BlockSpec((1, CHUNK, LANES), lambda p, i: (p, 0, 0)),
            scratch_shapes=[pltpu.VMEM((CHUNK, LANES), f32)],
        ),
        compiler_params=pltpu.CompilerParams(
            dimension_semantics=("parallel", "arbitrary"),
        ),
    )(logits, tgt, o1, o2, pw)

    # Tiny final reduction (<= n_par*1024 elements) done in XLA.
    return jnp.sum(partial)


def _reference(outputs, targets, odds_p1, odds_p2, prob_p1_win):
    probs = jax.nn.softmax(outputs / 0.5, axis=1)
    t1 = (targets == 1).astype(jnp.float32)
    t0 = (targets == 0).astype(jnp.float32)
    eg = probs[:, 0] * t1 * (odds_p1 - 1) + probs[:, 1] * t0 * (odds_p2 - 1)
    el = probs[:, 0] * t1 * -1.0 + probs[:, 1] * t0 * -1.0
    ep = eg + el
    tpp = t1 * (odds_p1 - 1) + t0 * (odds_p2 - 1)
    owp = (jnp.where(odds_p1 > 4, (1 - probs[:, 1]) * odds_p1, 0.0).sum()
           + jnp.where(odds_p2 > 4, (1 - probs[:, 0]) * odds_p2, 0.0).sum())
    ncw = jnp.where((prob_p1_win < 0.6) & (prob_p1_win > 0.4),
                    (1 - probs[:, 2]) * (1 + 2 / (odds_p1 + odds_p2)), 0.0).sum()
    a = jnp.mean((ep - tpp) ** 2)
    return a - ep.mean() + owp + 5 * ncw


def _make_inputs(key, B):
    k1, k2, k3, k4, k5 = jax.random.split(key, 5)
    outputs = jax.random.normal(k1, (B, 3), dtype=jnp.float32)
    targets = jax.random.randint(k2, (B,), 0, 2).astype(jnp.float32)
    odds_p1 = jax.random.uniform(k3, (B,), minval=1.1, maxval=6.0, dtype=jnp.float32)
    odds_p2 = jax.random.uniform(k4, (B,), minval=1.1, maxval=6.0, dtype=jnp.float32)
    prob_p1_win = jax.random.uniform(k5, (B,), minval=0.0, maxval=1.0, dtype=jnp.float32)
    return outputs, targets, odds_p1, odds_p2, prob_p1_win


if __name__ == "__main__":
    # Small single-block case (B=8 -> one (8,128) tile, heavy tail masking).
    args_small = _make_inputs(jax.random.PRNGKey(0), 8)
    loss_small = custom_loss(*args_small)
    jax.block_until_ready(loss_small)
    ref_small = _reference(*args_small)
    assert jnp.allclose(loss_small, ref_small, rtol=1e-5, atol=1e-5), (loss_small, ref_small)

    # Multi-step reduction axis (3 blocks of 8 rows) + masked ragged tail.
    args_mid = _make_inputs(jax.random.PRNGKey(1), 2100)
    loss_mid = custom_loss(*args_mid, block_rows=8)
    jax.block_until_ready(loss_mid)
    ref_mid = _reference(*args_mid)
    assert jnp.allclose(loss_mid, ref_mid, rtol=1e-5, atol=1e-5), (loss_mid, ref_mid)

    # Even block count -> exercises the 2-way "parallel" core split + tail mask.
    args_par = _make_inputs(jax.random.PRNGKey(2), 1990)
    loss_par = custom_loss(*args_par, block_rows=8)
    jax.block_until_ready(loss_par)
    ref_par = _reference(*args_par)
    assert jnp.allclose(loss_par, ref_par, rtol=1e-5, atol=1e-5), (loss_par, ref_par)

    print("KERNEL_OK")
</pallas_src>

<mosaic_0001>
module attributes {stable_mosaic.version = 11 : i64} {
  func.func @_custom_loss_kernel(%arg0: i32, %arg1: i32, %arg2: memref<3x8x128xf32, #tpu.memory_space<vmem>>, %arg3: memref<8x128xf32, #tpu.memory_space<vmem>>, %arg4: memref<8x128xf32, #tpu.memory_space<vmem>>, %arg5: memref<8x128xf32, #tpu.memory_space<vmem>>, %arg6: memref<8x128xf32, #tpu.memory_space<vmem>>, %arg7: memref<1x8x128xf32, #tpu.memory_space<vmem>>, %arg8: memref<8x128xf32, #tpu.memory_space<vmem>>) attributes {dimension_semantics = [#tpu.dimension_semantics<parallel>, #tpu.dimension_semantics<arbitrary>], iteration_bounds = array<i64: 1, 1>, scalar_prefetch = 0 : i64, scratch_operands = 1 : i64, tpu.core_type = #tpu.core_type<tc>, window_params = [{transform_indices = @transform_0, window_bounds = array<i64: 3, 8, 128>}, {transform_indices = @transform_1, window_bounds = array<i64: 8, 128>}, {transform_indices = @transform_2, window_bounds = array<i64: 8, 128>}, {transform_indices = @transform_3, window_bounds = array<i64: 8, 128>}, {transform_indices = @transform_4, window_bounds = array<i64: 8, 128>}, {transform_indices = @transform_5, window_bounds = array<i64: 1, 8, 128>}]} {
    %c0_i32 = arith.constant 0 : i32
    %0 = arith.cmpi eq, %arg1, %c0_i32 : i32
    %1 = arith.extui %0 : i1 to i32
    %c0_i32_0 = arith.constant 0 : i32
    %2 = arith.cmpi ne, %1, %c0_i32_0 : i32
    scf.if %2 {
      %cst_39 = arith.constant 0.000000e+00 : f32
      %126 = vector.broadcast %cst_39 : f32 to vector<8x128xf32>
      %c0_40 = arith.constant 0 : index
      %c0_41 = arith.constant 0 : index
      %127 = vector.load %arg8[%c0_40, %c0_41] : memref<8x128xf32, #tpu.memory_space<vmem>>, vector<8x128xf32>
      tpu.vector_store %arg8[%c0_40, %c0_41], %126 {strides = array<i32>} : memref<8x128xf32, #tpu.memory_space<vmem>>, vector<8x128xf32>,
    } else {
    }
    %c1_i32 = arith.constant 1 : i32
    %3 = arith.muli %arg0, %c1_i32 : i32
    %4 = arith.addi %3, %arg1 : i32
    %c1024_i32 = arith.constant 1024 : i32
    %5 = arith.muli %4, %c1024_i32 : i32
    %6 = tpu.iota {dimensions = array<i32: 0>} : vector<8x128xi32>
    %7 = tpu.iota {dimensions = array<i32: 1>} : vector<8x128xi32>
    %c128_i32 = arith.constant 128 : i32
    %8 = vector.broadcast %c128_i32 : i32 to vector<8x128xi32>
    %9 = arith.muli %6, %8 : vector<8x128xi32>
    %10 = arith.addi %9, %7 : vector<8x128xi32>
    %c0_i32_1 = arith.constant 0 : i32
    %c8_i32 = arith.constant 8 : i32
    %11 = arith.muli %c0_i32_1, %c8_i32 : i32
    %12 = tpu.assume_multiple %11, 8 : i32
    %c0 = arith.constant 0 : index
    %13 = arith.index_cast %12 : i32 to index
    %c0_2 = arith.constant 0 : index
    %14 = vector.load %arg2[%c0, %13, %c0_2] : memref<3x8x128xf32, #tpu.memory_space<vmem>>, vector<1x8x128xf32>
    %15 = vector.shape_cast %14 : vector<1x8x128xf32> to vector<8x128xf32>
    %cst = arith.constant 2.000000e+00 : f32
    %16 = vector.broadcast %cst : f32 to vector<8x128xf32>
    %17 = arith.mulf %15, %16 : vector<8x128xf32>
    %c1 = arith.constant 1 : index
    %18 = arith.index_cast %12 : i32 to index
    %c0_3 = arith.constant 0 : index
    %19 = vector.load %arg2[%c1, %18, %c0_3] : memref<3x8x128xf32, #tpu.memory_space<vmem>>, vector<1x8x128xf32>
    %20 = vector.shape_cast %19 : vector<1x8x128xf32> to vector<8x128xf32>
    %cst_4 = arith.constant 2.000000e+00 : f32
    %21 = vector.broadcast %cst_4 : f32 to vector<8x128xf32>
    %22 = arith.mulf %20, %21 : vector<8x128xf32>
    %c2 = arith.constant 2 : index
    %23 = arith.index_cast %12 : i32 to index
    %c0_5 = arith.constant 0 : index
    %24 = vector.load %arg2[%c2, %23, %c0_5] : memref<3x8x128xf32, #tpu.memory_space<vmem>>, vector<1x8x128xf32>
    %25 = vector.shape_cast %24 : vector<1x8x128xf32> to vector<8x128xf32>
    %cst_6 = arith.constant 2.000000e+00 : f32
    %26 = vector.broadcast %cst_6 : f32 to vector<8x128xf32>
    %27 = arith.mulf %25, %26 : vector<8x128xf32>
    %28 = arith.index_cast %12 : i32 to index
    %c0_7 = arith.constant 0 : index
    %29 = vector.load %arg3[%28, %c0_7] : memref<8x128xf32, #tpu.memory_space<vmem>>, vector<8x128xf32>
    %30 = arith.index_cast %12 : i32 to index
    %c0_8 = arith.constant 0 : index
    %31 = vector.load %arg4[%30, %c0_8] : memref<8x128xf32, #tpu.memory_space<vmem>>, vector<8x128xf32>
    %32 = arith.index_cast %12 : i32 to index
    %c0_9 = arith.constant 0 : index
    %33 = vector.load %arg5[%32, %c0_9] : memref<8x128xf32, #tpu.memory_space<vmem>>, vector<8x128xf32>
    %34 = arith.index_cast %12 : i32 to index
    %c0_10 = arith.constant 0 : index
    %35 = vector.load %arg6[%34, %c0_10] : memref<8x128xf32, #tpu.memory_space<vmem>>, vector<8x128xf32>
    %36 = arith.maximumf %17, %22 : vector<8x128xf32>
    %37 = arith.maximumf %36, %27 : vector<8x128xf32>
    %38 = arith.subf %17, %37 : vector<8x128xf32>
    %39 = math.exp %38 : vector<8x128xf32>
    %40 = arith.subf %22, %37 : vector<8x128xf32>
    %41 = math.exp %40 : vector<8x128xf32>
    %42 = arith.subf %27, %37 : vector<8x128xf32>
    %43 = math.exp %42 : vector<8x128xf32>
    %44 = arith.addf %39, %41 : vector<8x128xf32>
    %45 = arith.addf %44, %43 : vector<8x128xf32>
    %cst_11 = arith.constant 1.000000e+00 : f32
    %46 = vector.broadcast %cst_11 : f32 to vector<8x128xf32>
    %47 = arith.divf %46, %45 : vector<8x128xf32>
    %48 = arith.mulf %39, %47 : vector<8x128xf32>
    %49 = arith.mulf %41, %47 : vector<8x128xf32>
    %50 = arith.mulf %43, %47 : vector<8x128xf32>
    %cst_12 = arith.constant 1.000000e+00 : f32
    %51 = vector.broadcast %cst_12 : f32 to vector<8x128xf32>
    %52 = arith.cmpf oeq, %29, %51 : vector<8x128xf32>
    %53 = arith.extui %52 : vector<8x128xi1> to vector<8x128xi32>
    %54 = arith.sitofp %53 : vector<8x128xi32> to vector<8x128xf32>
    %cst_13 = arith.constant 0.000000e+00 : f32
    %55 = vector.broadcast %cst_13 : f32 to vector<8x128xf32>
    %56 = arith.cmpf oeq, %29, %55 : vector<8x128xf32>
    %57 = arith.extui %56 : vector<8x128xi1> to vector<8x128xi32>
    %58 = arith.sitofp %57 : vector<8x128xi32> to vector<8x128xf32>
    %59 = arith.mulf %48, %54 : vector<8x128xf32>
    %cst_14 = arith.constant 2.000000e+00 : f32
    %60 = vector.broadcast %cst_14 : f32 to vector<8x128xf32>
    %61 = arith.subf %31, %60 : vector<8x128xf32>
    %62 = arith.mulf %59, %61 : vector<8x128xf32>
    %63 = arith.mulf %49, %58 : vector<8x128xf32>
    %cst_15 = arith.constant 2.000000e+00 : f32
    %64 = vector.broadcast %cst_15 : f32 to vector<8x128xf32>
    %65 = arith.subf %33, %64 : vector<8x128xf32>
    %66 = arith.mulf %63, %65 : vector<8x128xf32>
    %67 = arith.addf %62, %66 : vector<8x128xf32>
    %cst_16 = arith.constant 1.000000e+00 : f32
    %68 = vector.broadcast %cst_16 : f32 to vector<8x128xf32>
    %69 = arith.subf %31, %68 : vector<8x128xf32>
    %70 = arith.mulf %54, %69 : vector<8x128xf32>
    %cst_17 = arith.constant 1.000000e+00 : f32
    %71 = vector.broadcast %cst_17 : f32 to vector<8x128xf32>
    %72 = arith.subf %33, %71 : vector<8x128xf32>
    %73 = arith.mulf %58, %72 : vector<8x128xf32>
    %74 = arith.addf %70, %73 : vector<8x128xf32>
    %75 = arith.subf %67, %74 : vector<8x128xf32>
    %cst_18 = arith.constant 0.000000e+00 : f32
    %76 = vector.broadcast %cst_18 : f32 to vector<8x128xf32>
    %cst_19 = arith.constant 4.000000e+00 : f32
    %77 = vector.broadcast %cst_19 : f32 to vector<8x128xf32>
    %78 = arith.cmpf ogt, %31, %77 : vector<8x128xf32>
    %cst_20 = arith.constant 1.000000e+00 : f32
    %79 = vector.broadcast %cst_20 : f32 to vector<8x128xf32>
    %80 = arith.subf %79, %49 : vector<8x128xf32>
    %81 = arith.mulf %80, %31 : vector<8x128xf32>
    %82 = arith.select %78, %81, %76 : vector<8x128xi1>, vector<8x128xf32>
    %cst_21 = arith.constant 4.000000e+00 : f32
    %83 = vector.broadcast %cst_21 : f32 to vector<8x128xf32>
    %84 = arith.cmpf ogt, %33, %83 : vector<8x128xf32>
    %cst_22 = arith.constant 1.000000e+00 : f32
    %85 = vector.broadcast %cst_22 : f32 to vector<8x128xf32>
    %86 = arith.subf %85, %48 : vector<8x128xf32>
    %87 = arith.mulf %86, %33 : vector<8x128xf32>
    %88 = arith.select %84, %87, %76 : vector<8x128xi1>, vector<8x128xf32>
    %cst_23 = arith.constant 6.000000e-01 : f32
    %89 = vector.broadcast %cst_23 : f32 to vector<8x128xf32>
    %90 = arith.cmpf olt, %35, %89 : vector<8x128xf32>
    %cst_24 = arith.constant 4.000000e-01 : f32
    %91 = vector.broadcast %cst_24 : f32 to vector<8x128xf32>
    %92 = arith.cmpf ogt, %35, %91 : vector<8x128xf32>
    %93 = arith.andi %90, %92 : vector<8x128xi1>
    %cst_25 = arith.constant 1.000000e+00 : f32
    %94 = vector.broadcast %cst_25 : f32 to vector<8x128xf32>
    %95 = arith.subf %94, %50 : vector<8x128xf32>
    %96 = arith.addf %31, %33 : vector<8x128xf32>
    %cst_26 = arith.constant 2.000000e+00 : f32
    %97 = vector.broadcast %cst_26 : f32 to vector<8x128xf32>
    %98 = arith.divf %97, %96 : vector<8x128xf32>
    %cst_27 = arith.constant 1.000000e+00 : f32
    %99 = vector.broadcast %cst_27 : f32 to vector<8x128xf32>
    %100 = arith.addf %99, %98 : vector<8x128xf32>
    %101 = arith.mulf %95, %100 : vector<8x128xf32>
    %102 = arith.select %93, %101, %76 : vector<8x128xi1>, vector<8x128xf32>
    %c1024_i32_28 = arith.constant 1024 : i32
    %103 = arith.muli %c0_i32_1, %c1024_i32_28 : i32
    %104 = arith.addi %5, %103 : i32
    %c8_i32_29 = arith.constant 8 : i32
    %105 = arith.subi %c8_i32_29, %104 : i32
    %106 = vector.broadcast %105 : i32 to vector<8x128xi32>
    %107 = arith.cmpi slt, %10, %106 : vector<8x128xi32>
    %108 = arith.extui %107 : vector<8x128xi1> to vector<8x128xi32>
    %109 = arith.sitofp %108 : vector<8x128xi32> to vector<8x128xf32>
    %110 = arith.mulf %75, %75 : vector<8x128xf32>
    %111 = arith.subf %110, %67 : vector<8x128xf32>
    %cst_30 = arith.constant 1.250000e-01 : f32
    %112 = vector.broadcast %cst_30 : f32 to vector<8x128xf32>
    %113 = arith.mulf %111, %112 : vector<8x128xf32>
    %114 = arith.addf %113, %82 : vector<8x128xf32>
    %115 = arith.addf %114, %88 : vector<8x128xf32>
    %cst_31 = arith.constant 5.000000e+00 : f32
    %116 = vector.broadcast %cst_31 : f32 to vector<8x128xf32>
    %117 = arith.mulf %116, %102 : vector<8x128xf32>
    %118 = arith.addf %115, %117 : vector<8x128xf32>
    %119 = arith.mulf %109, %118 : vector<8x128xf32>
    %c0_32 = arith.constant 0 : index
    %c0_33 = arith.constant 0 : index
    %120 = vector.load %arg8[%c0_32, %c0_33] : memref<8x128xf32, #tpu.memory_space<vmem>>, vector<8x128xf32>
    %121 = arith.addf %120, %119 : vector<8x128xf32>
    %c0_34 = arith.constant 0 : index
    %c0_35 = arith.constant 0 : index
    %122 = vector.load %arg8[%c0_34, %c0_35] : memref<8x128xf32, #tpu.memory_space<vmem>>, vector<8x128xf32>
    tpu.vector_store %arg8[%c0_34, %c0_35], %121 {strides = array<i32>} : memref<8x128xf32, #tpu.memory_space<vmem>>, vector<8x128xf32>,
    %c1_i32_36 = arith.constant 1 : i32
    %c0_i32_37 = arith.constant 0 : i32
    %123 = arith.cmpi eq, %arg1, %c0_i32_37 : i32
    %124 = arith.extui %123 : i1 to i32
    %c0_i32_38 = arith.constant 0 : i32
    %125 = arith.cmpi ne, %124, %c0_i32_38 : i32
    scf.if %125 {
      %c0_39 = arith.constant 0 : index
      %c0_40 = arith.constant 0 : index
      %126 = vector.load %arg8[%c0_39, %c0_40] : memref<8x128xf32, #tpu.memory_space<vmem>>, vector<8x128xf32>
      %c0_41 = arith.constant 0 : index
      %c0_42 = arith.constant 0 : index
      %c0_43 = arith.constant 0 : index
      %127 = vector.load %arg7[%c0_41, %c0_42, %c0_43] : memref<1x8x128xf32, #tpu.memory_space<vmem>>, vector<1x8x128xf32>
      %128 = vector.shape_cast %127 : vector<1x8x128xf32> to vector<8x128xf32>
      %129 = vector.shape_cast %126 : vector<8x128xf32> to vector<1x8x128xf32>
      tpu.vector_store %arg7[%c0_41, %c0_42, %c0_43], %129 {strides = array<i32>} : memref<1x8x128xf32, #tpu.memory_space<vmem>>, vector<1x8x128xf32>,
    } else {
    }
    return
  }
  func.func @transform_0(%arg0: i32, %arg1: i32) -> (i32, i32, i32) {
    %c1_i32 = arith.constant 1 : i32
    %0 = arith.muli %arg0, %c1_i32 : i32
    %1 = arith.addi %0, %arg1 : i32
    %c0_i32 = arith.constant 0 : i32
    %c0_i32_0 = arith.constant 0 : i32
    %c0_i32_1 = arith.constant 0 : i32
    return %c0_i32, %1, %c0_i32_0 : i32, i32, i32
  }
  func.func @transform_1(%arg0: i32, %arg1: i32) -> (i32, i32) {
    %c1_i32 = arith.constant 1 : i32
    %0 = arith.muli %arg0, %c1_i32 : i32
    %1 = arith.addi %0, %arg1 : i32
    %c0_i32 = arith.constant 0 : i32
    %c0_i32_0 = arith.constant 0 : i32
    return %1, %c0_i32 : i32, i32
  }
  func.func @transform_2(%arg0: i32, %arg1: i32) -> (i32, i32) {
    %c1_i32 = arith.constant 1 : i32
    %0 = arith.muli %arg0, %c1_i32 : i32
    %1 = arith.addi %0, %arg1 : i32
    %c0_i32 = arith.constant 0 : i32
    %c0_i32_0 = arith.constant 0 : i32
    return %1, %c0_i32 : i32, i32
  }
  func.func @transform_3(%arg0: i32, %arg1: i32) -> (i32, i32) {
    %c1_i32 = arith.constant 1 : i32
    %0 = arith.muli %arg0, %c1_i32 : i32
    %1 = arith.addi %0, %arg1 : i32
    %c0_i32 = arith.constant 0 : i32
    %c0_i32_0 = arith.constant 0 : i32
    return %1, %c0_i32 : i32, i32
  }
  func.func @transform_4(%arg0: i32, %arg1: i32) -> (i32, i32) {
    %c1_i32 = arith.constant 1 : i32
    %0 = arith.muli %arg0, %c1_i32 : i32
    %1 = arith.addi %0, %arg1 : i32
    %c0_i32 = arith.constant 0 : i32
    %c0_i32_0 = arith.constant 0 : i32
    return %1, %c0_i32 : i32, i32
  }
  func.func @transform_5(%arg0: i32, %arg1: i32) -> (i32, i32, i32) {
    %c0_i32 = arith.constant 0 : i32
    %c0_i32_0 = arith.constant 0 : i32
    %c0_i32_1 = arith.constant 0 : i32
    return %arg0, %c0_i32, %c0_i32_0 : i32, i32, i32
  }
}

</mosaic_0001>

<llo_original>
// kernel: tpu_custom_call.1
$region0: #{tpu_custom_call.1}
  #allocation0 [shape = 'u32[]', space=smem, size = 0x4, offset = 0x4, fixed_abs, tag = 'smem constant byte address 0x4 - core index']
  #allocation1 [shape = 'u32[144,128]{1,0:T(1,128)}', space=vmem, size = 0x12000, scoped, tag = 'internal scratch']
  #allocation2 [shape = 'f32[8,128]{1,0:T(8,128)}', space=vmem, size = 0x1000, scoped, tag = 'scratch operand']
  %s0 = inlined_call_operand.hbm [shape: f32[3,8,128], index: 0, kind: input, shape index: {}]
  %s1 = inlined_call_operand.hbm [shape: f32[8,128], index: 1, kind: input, shape index: {}]
  %s2 = inlined_call_operand.hbm [shape: f32[8,128], index: 2, kind: input, shape index: {}]
  %s3 = inlined_call_operand.vmem [shape: f32[8,128], index: 3, kind: input, shape index: {}]
  %s4 = inlined_call_operand.hbm [shape: f32[8,128], index: 4, kind: input, shape index: {}]
  %s5 = inlined_call_operand.hbm [shape: f32[1,8,128], index: 5, kind: output, shape index: {}]
  %s6 = sld [smem:[#allocation0]]
  $region54: #{tpu_custom_call.1} parent=0
    _
  %s8 = ssub.s32 1, %s6
  %s9 = scalar_select 0, %s8, %s6
  $region1: #{tpu_custom_call.1} parent=0
    #allocation3 [shape = 'u8[12288]{0}', space=vmem, size = 0x3000, scoped, tag = 'input window, operand 0, single buffered']
    #allocation4 [shape = 's32[1]{0}', space=sflag, size = 0x4, scoped, tag = 'scoped memory for tpu_custom_call.1']
    #allocation5 [shape = 's32[1]{0}', space=sflag, size = 0x4, scoped, tag = 'scoped memory for tpu_custom_call.1']
    #allocation6 [shape = 'u8[4096]{0}', space=vmem, size = 0x1000, scoped, tag = 'input window, operand 1, single buffered']
    #allocation7 [shape = 's32[1]{0}', space=sflag, size = 0x4, scoped, tag = 'scoped memory for tpu_custom_call.1']
    #allocation8 [shape = 'u8[4096]{0}', space=vmem, size = 0x1000, scoped, tag = 'input window, operand 2, single buffered']
    #allocation9 [shape = 'u8[4096]{0}', space=vmem, size = 0x1000, scoped, tag = 'input window, operand 4, single buffered']
    #allocation10 [shape = 's32[1]{0}', space=sflag, size = 0x4, scoped, tag = 'scoped memory for tpu_custom_call.1']
    #allocation11 [shape = 'u8[4096]{0}', space=vmem, size = 0x1000, scoped, tag = 'output window, operand 0, single buffered']
    %10 = vsyncpa [#allocation4], 0
    %11 = vsyncpa [#allocation7], 0
    %12 = vsyncpa [#allocation10], 0
    %13 = vsyncpa [#allocation5], 0
    // Predicated region
    $region2: #{tpu_custom_call.1} parent=1 // pred_check
      _
    $region3: #{tpu_custom_call.1} parent=1 // pred_check_branch
      %15 = sbr.rel (0) target = $region5
    $region4: #{tpu_custom_call.1} parent=1 // pred_region
      %s16 = sadd.s32 0, 0
      %s18 = ssub.s32 384, 384
      %19 = vsyncadd [#allocation4], %s18
      %s20 = smul.addr %s16, 128
      %s21 = scalar_lea.hbm %s0, %s20
      %s22 = sshll.u32 [#allocation3], 4
      %s23 = int_to_ptr.vmem [resolvable:$true] %s22
      %28 = dma.hbm_to_vmem [thread:$0]  %s21, 384, %s23, [#allocation4], 128, 128, 8
    $region5: #{tpu_custom_call.1} parent=1 // pred_fallthru
      _
    // Predicated region
    $region6: #{tpu_custom_call.1} parent=1 // pred_check
      _
    $region7: #{tpu_custom_call.1} parent=1 // pred_check_branch
      %30 = sbr.rel (0) target = $region9
    $region8: #{tpu_custom_call.1} parent=1 // pred_region
      %s31 = sadd.s32 0, 0
      %s33 = ssub.s32 128, 128
      %34 = vsyncadd [#allocation7], %s33
      %s35 = smul.addr %s31, 128
      %s36 = scalar_lea.hbm %s1, %s35
      %s38 = sshll.u32 [#allocation6], 4
      %s39 = int_to_ptr.vmem [resolvable:$true] %s38
      %41 = dma.hbm_to_vmem [thread:$0]  %s36, 128, %s39, [#allocation7]
    $region9: #{tpu_custom_call.1} parent=1 // pred_fallthru
      _
    // Predicated region
    $region10: #{tpu_custom_call.1} parent=1 // pred_check
      _
    $region11: #{tpu_custom_call.1} parent=1 // pred_check_branch
      %43 = sbr.rel (0) target = $region13
    $region12: #{tpu_custom_call.1} parent=1 // pred_region
      %s44 = sadd.s32 0, 0
      %s46 = ssub.s32 128, 128
      %47 = vsyncadd [#allocation7], %s46
      %s48 = smul.addr %s44, 128
      %s49 = scalar_lea.hbm %s2, %s48
      %s51 = sshll.u32 [#allocation8], 4
      %s52 = int_to_ptr.vmem [resolvable:$true] %s51
      %54 = dma.hbm_to_vmem [thread:$0]  %s49, 128, %s52, [#allocation7]
    $region13: #{tpu_custom_call.1} parent=1 // pred_fallthru
      _
    // Predicated region
    $region14: #{tpu_custom_call.1} parent=1 // pred_check
      _
    $region15: #{tpu_custom_call.1} parent=1 // pred_check_branch
      %56 = sbr.rel (0) target = $region17
    $region16: #{tpu_custom_call.1} parent=1 // pred_region
      %s57 = sadd.s32 0, 0
      %p58 = scmp.lt.s32.totalorder %s57, 0
      %s59 = scalar_select %p58, %s57, 0
      %s60 = smul.addr %s59, 8
      %s61 = scalar_lea.vmem %s3, %s60
      %s62 = sadd.s32 0, 0
    $region17: #{tpu_custom_call.1} parent=1 // pred_fallthru
      _
    // Predicated region
    $region18: #{tpu_custom_call.1} parent=1 // pred_check
      _
    $region19: #{tpu_custom_call.1} parent=1 // pred_check_branch
      %64 = sbr.rel (0) target = $region21
    $region20: #{tpu_custom_call.1} parent=1 // pred_region
      %s65 = sadd.s32 0, 0
      %s67 = ssub.s32 128, 128
      %68 = vsyncadd [#allocation10], %s67
      %s69 = smul.addr %s65, 128
      %s70 = scalar_lea.hbm %s4, %s69
      %s72 = sshll.u32 [#allocation9], 4
      %s73 = int_to_ptr.vmem [resolvable:$true] %s72
      %75 = dma.hbm_to_vmem [thread:$0]  %s70, 128, %s73, [#allocation10]
    $region21: #{tpu_custom_call.1} parent=1 // pred_fallthru
      _
    // Predicated region
    $region22: #{tpu_custom_call.1} parent=1 // pred_check
      _
    $region23: #{tpu_custom_call.1} parent=1 // pred_check_branch
      %77 = sbr.rel (0) target = $region25
    $region24: #{tpu_custom_call.1} parent=1 // pred_region
      %78 = dma.done [#allocation4], 384
    $region25: #{tpu_custom_call.1} parent=1 // pred_fallthru
      _
    // Predicated region
    $region26: #{tpu_custom_call.1} parent=1 // pred_check
      _
    $region27: #{tpu_custom_call.1} parent=1 // pred_check_branch
      %80 = sbr.rel (0) target = $region29
    $region28: #{tpu_custom_call.1} parent=1 // pred_region
      %81 = dma.done [#allocation7], 128
    $region29: #{tpu_custom_call.1} parent=1 // pred_fallthru
      _
    // Predicated region
    $region30: #{tpu_custom_call.1} parent=1 // pred_check
      _
    $region31: #{tpu_custom_call.1} parent=1 // pred_check_branch
      %83 = sbr.rel (0) target = $region33
    $region32: #{tpu_custom_call.1} parent=1 // pred_region
      %84 = dma.done [#allocation7], 128
    $region33: #{tpu_custom_call.1} parent=1 // pred_fallthru
      _
    // Predicated region
    $region34: #{tpu_custom_call.1} parent=1 // pred_check
      _
    $region35: #{tpu_custom_call.1} parent=1 // pred_check_branch
      %86 = sbr.rel (0) target = $region37
    $region36: #{tpu_custom_call.1} parent=1 // pred_region
      %87 = dma.done [#allocation10], 128
    $region37: #{tpu_custom_call.1} parent=1 // pred_fallthru
      _
    %s88 = sadd.s32 0, 0
    %p89 = scmp.lt.s32.totalorder %s88, 0
    %s90 = scalar_select %p89, %s88, 0
    %s91 = smul.addr %s90, 8
    %s92 = scalar_lea.vmem %s3, %s91
    %s93 = sadd.s32 0, 0
    %s94 = sadd.s32 0, 0
    %s95 = sadd.s32 0, 0
    %s96 = sadd.s32 0, 0
    %p97 = scmp.lt.s32.totalorder %s96, 0
    %s98 = scalar_select %p97, %s96, 0
    %s99 = smul.addr %s98, 8
    %s100 = scalar_lea.vmem %s3, %s99
    %s101 = sadd.s32 0, 0
    %s102 = sadd.s32 0, 0
    %p103 = scmp.eq.s32.totalorder 0, 0
    // Predicated region
    $region38: #{tpu_custom_call.1} parent=1 // pred_check
      %p104 = pneg %p103
    $region39: #{tpu_custom_call.1} parent=1 // pred_check_branch
      %106 = sbr.rel (%p104) target = $region41
    $region40: #{tpu_custom_call.1} parent=1 // pred_region
      %107 = vst [vmem:[#allocation2] sm:$0xff] 0.0
    $region41: #{tpu_custom_call.1} parent=1 // pred_fallthru
      _
    %s108 = sadd.s32 0, 0
    %s109 = smul.u32 %s108, 1024
    %v110 = vlaneseq
    %v111 = vshrl.u32 %v110, 7
    %v112 = vlaneseq
    %v113 = vand.u32 %v112, 127
    %v114 = vmul.u32 %v111, 128
    %v115 = vadd.s32 %v114, %v113
    %v116 = vld [vmem:[#allocation3] sm:$0xff]
    %v117 = vmul.f32 %v116, 2.0
    %s118 = sadd.s32 0, 8
    %s119 = scalar_lea.vmem [#allocation3], %s118
    %v120 = vld [vmem:[%s119] sm:$0xff]
    %v121 = vmul.f32 %v120, 2.0
    %s122 = sadd.s32 0, 16
    %s123 = scalar_lea.vmem [#allocation3], %s122
    %v124 = vld [vmem:[%s123] sm:$0xff]
    %v125 = vmul.f32 %v124, 2.0
    %v126 = vld [vmem:[#allocation6] sm:$0xff]
    %v127 = vld [vmem:[#allocation8] sm:$0xff]
    %v128 = vld [vmem:[%s100] sm:$0xff]
    %v129 = vld [vmem:[#allocation9] sm:$0xff]
    %v130 = vmax.f32 %v117, %v121
    %v131 = vmax.f32 %v130, %v125
    %v132 = vsub.f32 %v117, %v131
    %v133 = vmul.f32 %v132, 1.442695
    %v134 = vpow.pop %v133
    %v135 = vsub.f32 %v121, %v131
    %v136 = vmul.f32 %v135, 1.442695
    %v137 = vpow.pop %v136
    %v138 = vsub.f32 %v125, %v131
    %v139 = vmul.f32 %v138, 1.442695
    %v140 = vpow.pop %v139
    %v141 = vadd.f32 %v134, %v137
    %v142 = vadd.f32 %v141, %v140
    %v143 = vrcp.pop %v142
    %v144 = vmul.f32 1.0, %v143
    %v145 = vmul.f32 %v134, %v144
    %v146 = vmul.f32 %v137, %v144
    %v147 = vmul.f32 %v140, %v144
    %vm148 = vcmp.eq.f32.partialorder %v126, 1.0
    %v149 = vsel %vm148, 1, 0
    %v150 = vcvt.s32.f32 %v149
    %vm151 = vcmp.eq.f32.partialorder %v126, 0.0
    %v152 = vsel %vm151, 1, 0
    %v153 = vcvt.s32.f32 %v152
    %v154 = vmul.f32 %v145, %v150
    %v155 = vsub.f32 %v127, 2.0
    %v156 = vmul.f32 %v154, %v155
    %v157 = vmul.f32 %v146, %v153
    %v158 = vsub.f32 %v128, 2.0
    %v159 = vmul.f32 %v157, %v158
    %v160 = vadd.f32 %v156, %v159
    %v161 = vsub.f32 %v127, 1.0
    %v162 = vmul.f32 %v150, %v161
    %v163 = vsub.f32 %v128, 1.0
    %v164 = vmul.f32 %v153, %v163
    %v165 = vadd.f32 %v162, %v164
    %v166 = vsub.f32 %v160, %v165
    %vm167 = vcmp.gt.f32.partialorder %v127, 4.0
    %v168 = vsub.f32 1.0, %v146
    %v169 = vmul.f32 %v168, %v127
    %v170 = vsel %vm167, %v169, 0.0
    %vm171 = vcmp.gt.f32.partialorder %v128, 4.0
    %v172 = vsub.f32 1.0, %v145
    %v173 = vmul.f32 %v172, %v128
    %v174 = vsel %vm171, %v173, 0.0
    %vm175 = vcmp.lt.f32.partialorder %v129, 0.6
    %vm176 = vcmp.gt.f32.partialorder %v129, 0.4
    %vm177 = vmand %vm175, %vm176
    %v178 = vsub.f32 1.0, %v147
    %v179 = vadd.f32 %v127, %v128
    %v180 = vrcp.pop %v179
    %v181 = vmul.f32 2.0, %v180
    %v182 = vadd.f32 %v181, 1.0
    %v183 = vmul.f32 %v178, %v182
    %v184 = vsel %vm177, %v183, 0.0
    %s185 = ssub.s32 8, %s109
    %v186 = vstv %s185
    %vm187 = vcmp.lt.s32.totalorder %v115, %v186
    %v188 = vsel %vm187, 1, 0
    %v189 = vcvt.s32.f32 %v188
    %v190 = vmul.f32 %v166, %v166
    %v191 = vsub.f32 %v190, %v160
    %v192 = vmul.f32 %v191, 0.125
    %v193 = vadd.f32 %v192, %v170
    %v194 = vadd.f32 %v193, %v174
    %v195 = vmul.f32 %v184, 5.0
    %v196 = vadd.f32 %v194, %v195
    %v197 = vmul.f32 %v189, %v196
    %v198 = vld [vmem:[#allocation2] sm:$0xff]
    %v199 = vadd.f32 %v198, %v197
    %200 = vst [vmem:[#allocation2] sm:$0xff] %v199
    // Predicated region
    $region42: #{tpu_custom_call.1} parent=1 // pred_check
      %p201 = pneg %p103
    $region43: #{tpu_custom_call.1} parent=1 // pred_check_branch
      %203 = sbr.rel (%p201) target = $region45
    $region44: #{tpu_custom_call.1} parent=1 // pred_region
      %v204 = vld [vmem:[#allocation2] sm:$0xff]
      %205 = vst [vmem:[#allocation11] sm:$0xff] %v204
    $region45: #{tpu_custom_call.1} parent=1 // pred_fallthru
      _
    // Predicated region
    $region46: #{tpu_custom_call.1} parent=1 // pred_check
      _
    $region47: #{tpu_custom_call.1} parent=1 // pred_check_branch
      %207 = sbr.rel (0) target = $region49
    $region48: #{tpu_custom_call.1} parent=1 // pred_region
      %s209 = ssub.s32 128, 128
      %210 = vsyncadd [#allocation5], %s209
      %s212 = sshll.u32 [#allocation11], 4
      %s213 = int_to_ptr.vmem [resolvable:$true] %s212
      %215 = dma.vmem_to_hbm [thread:$0]  %s213, 128, %s5, [#allocation5]
    $region49: #{tpu_custom_call.1} parent=1 // pred_fallthru
      _
    // Predicated region
    $region50: #{tpu_custom_call.1} parent=1 // pred_check
      _
    $region51: #{tpu_custom_call.1} parent=1 // pred_check_branch
      %217 = sbr.rel (0) target = $region53
    $region52: #{tpu_custom_call.1} parent=1 // pred_region
      %218 = dma.done [#allocation5], 128
    $region53: #{tpu_custom_call.1} parent=1 // pred_fallthru
      _
    %219 = vsyncpa [#allocation4], 1
    %220 = vsyncpa [#allocation7], 1
    %221 = vsyncpa [#allocation10], 1
    %222 = vsyncpa [#allocation5], 1

</llo_original>
